<compile_context>
chip_gen: v5e
topology: v5e:2x2
jax: 0.10.0
libtpu: 0.0.40
codegen_flags: <defaults>
</compile_context>

<pallas_src>
import functools

import jax
import jax.numpy as jnp
from jax import lax
from jax.experimental import pallas as pl
from jax.experimental.pallas import tpu as pltpu

LANES = 128
SUBLANES = 8
ALIGN = SUBLANES * LANES          # 1024-element alignment for the kernel region
MAX_TILE_ROWS = 8192              # (8192,128) f32 block = 4 MiB per input stream
CHUNK_ROWS = 256                  # ~128 KiB of live elementwise temporaries


def _focal_elementwise(x, t, *, gamma, smoothing):
    """Per-element label-smoothed focal BCE-with-logits, computed in f32."""
    x = x.astype(jnp.float32)
    t = t.astype(jnp.float32)
    # label smoothing (torch applies it under no_grad; forward value identical)
    t = t * (1.0 - smoothing) + 0.5 * smoothing
    # binary_cross_entropy_with_logits, numerically stable form:
    #   max(x, 0) - x*t + log(1 + exp(-|x|))
    bce = jnp.maximum(x, 0.0) - x * t + jnp.log1p(jnp.exp(-jnp.abs(x)))
    # focal modulation (1 - pt)**gamma with pt = exp(-bce)
    one_m_pt = 1.0 - jnp.exp(-bce)
    g = float(gamma)
    if g.is_integer() and 0.0 <= g <= 8.0:
        gi = int(g)
        if gi == 0:
            mod = jnp.ones_like(one_m_pt)
        else:
            mod = one_m_pt
            for _ in range(gi - 1):       # gamma=2 -> one extra VPU multiply
                mod = mod * one_m_pt
    else:
        mod = jnp.power(one_m_pt, gamma)  # non-integer gamma fallback
    return mod * bce


def _focal_loss_kernel(x_ref, t_ref, o_ref, acc_ref, *,
                       gamma, smoothing, tile_rows, chunk_rows, ragged_rows,
                       num_blocks, blocks_per_split, num_splits):
    c = pl.program_id(0)
    j = pl.program_id(1)
    b = c * blocks_per_split + j          # logical block id (may overshoot)

    @pl.when(j == 0)
    def _():
        acc_ref[...] = jnp.zeros_like(acc_ref)

    def chunk_sum(row0, nrows):
        # nrows is a static multiple of 8; row0 may be dynamic (loop index).
        x = x_ref[pl.ds(row0, nrows), :]
        t = t_ref[pl.ds(row0, nrows), :]
        f = _focal_elementwise(x, t, gamma=gamma, smoothing=smoothing)
        # per-vreg partial sums: pure VPU adds down to one (8,128) tile
        return f.reshape(nrows // SUBLANES, SUBLANES, LANES).sum(axis=0)

    def accumulate(n_rows):
        # n_rows is static.  Chunked so live f32 temporaries stay small instead
        # of materializing a (tile_rows,128) VMEM temp before the reduction.
        n_full = n_rows // chunk_rows
        rem = n_rows % chunk_rows
        if n_full > 0:
            def body(g, carry):
                row0 = pl.multiple_of(g * chunk_rows, chunk_rows)
                return carry + chunk_sum(row0, chunk_rows)
            acc_ref[...] += lax.fori_loop(
                0, n_full, body,
                jnp.zeros((SUBLANES, LANES), jnp.float32),
                unroll=min(4, n_full))
        if rem:
            acc_ref[...] += chunk_sum(n_full * chunk_rows, rem)

    has_ragged = ragged_rows != tile_rows                       # static bool
    has_overshoot = num_splits * blocks_per_split > num_blocks  # static bool

    if not has_ragged and not has_overshoot:
        accumulate(tile_rows)             # cheap unguarded path (common case)
    else:
        n_full_blocks = num_blocks - 1 if has_ragged else num_blocks

        @pl.when(b < n_full_blocks)
        def _():
            accumulate(tile_rows)

        if has_ragged:
            @pl.when(b == num_blocks - 1)
            def _():
                accumulate(ragged_rows)   # statically smaller row count

        # b >= num_blocks (overshot duplicate block): accumulate nothing.

    @pl.when(j == blocks_per_split - 1)
    def _():
        # single cross-lane (XLU) reduce per split, in the epilogue only
        o_ref[...] = jnp.sum(acc_ref[...], keepdims=True)


def label_smoothing_focal_loss(inputs, targets, *, alpha=1.0, gamma=2.0,
                               smoothing=0.1, reduction="mean",
                               max_tile_rows=MAX_TILE_ROWS,
                               chunk_rows=CHUNK_ROWS,
                               num_splits=1, core_parallel=False):
    """Forward pass of LabelSmoothingFocalLoss ('mean' / 'sum' reductions)."""
    if reduction not in ("mean", "sum"):
        # TODO(synk): 'none' reduction needs an element-wise out_spec (no reduce).
        raise NotImplementedError("only 'mean' and 'sum' reductions implemented")
    assert max_tile_rows % SUBLANES == 0 and chunk_rows % SUBLANES == 0

    x = jnp.reshape(inputs, (-1,))
    t = jnp.reshape(targets, (-1,))
    if x.shape != t.shape:
        raise ValueError("inputs and targets must have the same number of elements")
    n = x.shape[0]
    smoothing = float(smoothing)

    # Kernel handles the 1024-aligned prefix; the <=1023-element ragged tail is
    # summed with plain jnp ops below (no full-tensor jnp.pad copy in HBM).
    n_main = (n // ALIGN) * ALIGN
    total = jnp.zeros((), jnp.float32)

    if n_main:
        rows = n_main // LANES                          # multiple of 8
        x2 = jnp.reshape(x[:n_main], (rows, LANES))
        t2 = jnp.reshape(t[:n_main], (rows, LANES))

        tile_rows = min(max_tile_rows, rows)            # multiple of 8
        c_rows = min(chunk_rows, tile_rows)
        num_blocks = -(-rows // tile_rows)
        num_splits_eff = max(1, min(num_splits, num_blocks))
        blocks_per_split = -(-num_blocks // num_splits_eff)
        ragged_rows = rows - (num_blocks - 1) * tile_rows  # rows in last block

        kernel = functools.partial(
            _focal_loss_kernel, gamma=gamma, smoothing=smoothing,
            tile_rows=tile_rows, chunk_rows=c_rows, ragged_rows=ragged_rows,
            num_blocks=num_blocks, blocks_per_split=blocks_per_split,
            num_splits=num_splits_eff)

        def in_map(c, j):
            # Clamp a possible overshot duplicate block to the last real block;
            # the kernel skips its accumulation via pl.when.
            return (jnp.minimum(c * blocks_per_split + j, num_blocks - 1), 0)

        tile_spec = pl.BlockSpec((tile_rows, LANES), in_map)

        if core_parallel:
            # TODO(synk): only verified conceptually for v7x (2 TensorCores).
            dim_sem = (pltpu.CORE_PARALLEL, pltpu.ARBITRARY)
        else:
            dim_sem = ("parallel", "arbitrary")

        bytes_in = n_main * (x2.dtype.itemsize + t2.dtype.itemsize)
        cost = pl.CostEstimate(flops=15 * n_main,
                               transcendentals=3 * n_main,
                               bytes_accessed=bytes_in + 4 * num_splits_eff)

        partials = pl.pallas_call(
            kernel,
            out_shape=jax.ShapeDtypeStruct((num_splits_eff, 1), jnp.float32),
            grid_spec=pltpu.PrefetchScalarGridSpec(
                num_scalar_prefetch=0,
                grid=(num_splits_eff, blocks_per_split),
                in_specs=[tile_spec, tile_spec],
                out_specs=pl.BlockSpec((1, 1), lambda c, j: (c, 0)),
                scratch_shapes=[pltpu.VMEM((SUBLANES, LANES), jnp.float32)],
            ),
            compiler_params=pltpu.CompilerParams(
                dimension_semantics=dim_sem,
                vmem_limit_bytes=40 << 20),
            cost_estimate=cost,
        )(x2, t2)
        total = total + jnp.sum(partials)

    if n_main != n:
        # <=1023-element ragged tail, computed with a few plain jnp ops.
        total = total + jnp.sum(
            _focal_elementwise(x[n_main:], t[n_main:],
                               gamma=gamma, smoothing=smoothing))

    scale = float(alpha) / float(n) if reduction == "mean" else float(alpha)
    return total * scale


def _reference(inputs, targets, alpha=1.0, gamma=2.0, smoothing=0.1,
               reduction="mean"):
    x = jnp.reshape(inputs, (-1,)).astype(jnp.float32)
    t = jnp.reshape(targets, (-1,)).astype(jnp.float32)
    t = t * (1.0 - smoothing) + 0.5 * smoothing
    bce = jnp.maximum(x, 0.0) - x * t + jnp.log1p(jnp.exp(-jnp.abs(x)))
    pt = jnp.exp(-bce)
    f = alpha * (1.0 - pt) ** gamma * bce
    return jnp.mean(f) if reduction == "mean" else jnp.sum(f)


if __name__ == "__main__":
    key = jax.random.PRNGKey(0)
    ks = jax.random.split(key, 8)

    def check(got, want, rtol=1e-5, atol=1e-6, msg=""):
        got = jax.block_until_ready(got)
        assert jnp.allclose(got, want, rtol=rtol, atol=atol), (msg, got, want)

    # 1) module-typical NCHW logits + {0,1} targets (aligned, single block)
    x1 = jax.random.normal(ks[0], (2, 4, 16, 16), dtype=jnp.float32)
    t1 = (jax.random.uniform(ks[1], (2, 4, 16, 16)) > 0.5).astype(jnp.float32)
    check(label_smoothing_focal_loss(x1, t1), _reference(x1, t1), msg="aligned")

    # 2) tiny ragged input (n=105 < 1024): pure jnp tail path
    x2 = jax.random.normal(ks[2], (3, 5, 7), dtype=jnp.float32)
    t2 = (jax.random.uniform(ks[3], (3, 5, 7)) > 0.5).astype(jnp.float32)
    check(label_smoothing_focal_loss(x2, t2), _reference(x2, t2), msg="tiny")

    # 3) kernel main region + ragged tail + non-default params ('sum')
    x3 = jax.random.normal(ks[4], (5, 7, 97), dtype=jnp.float32)
    t3 = (jax.random.uniform(ks[5], (5, 7, 97)) > 0.5).astype(jnp.float32)
    check(label_smoothing_focal_loss(x3, t3, alpha=0.25, gamma=3.0,
                                     smoothing=0.2, reduction="sum"),
          _reference(x3, t3, alpha=0.25, gamma=3.0, smoothing=0.2,
                     reduction="sum"),
          msg="ragged-sum")

    # 4) ragged last kernel block + 2-way split (v7x-style), no overshoot
    x4 = jax.random.normal(ks[6], (24, 128), dtype=jnp.float32)
    t4 = (jax.random.uniform(ks[7], (24, 128)) > 0.5).astype(jnp.float32)
    check(label_smoothing_focal_loss(x4, t4, max_tile_rows=16, num_splits=2),
          _reference(x4, t4), msg="split-ragged")

    # 5) 2-way split with an overshot duplicate block (skip path)
    check(label_smoothing_focal_loss(x4, t4, max_tile_rows=8, num_splits=2),
          _reference(x4, t4), msg="split-overshoot")

    # 6) multi-chunk accumulation path (fori_loop + static remainder chunk)
    x6 = jax.random.normal(ks[0], (4, 10, 128), dtype=jnp.float32)
    t6 = (jax.random.uniform(ks[1], (4, 10, 128)) > 0.5).astype(jnp.float32)
    check(label_smoothing_focal_loss(x6, t6, chunk_rows=16),
          _reference(x6, t6), msg="chunks")

    # 7) bf16 streaming (half the HBM bytes); kernel casts to f32 in-register
    x7 = jax.random.normal(ks[2], (2, 16, 128), dtype=jnp.bfloat16)
    t7 = (jax.random.uniform(ks[3], (2, 16, 128)) > 0.5).astype(jnp.bfloat16)
    check(label_smoothing_focal_loss(x7, t7), _reference(x7, t7), msg="bf16")

    # 8) medium realistic size, default tiling (2048-row block, 8 x 256-row chunks)
    x8 = jax.random.normal(ks[4], (64, 32, 128), dtype=jnp.float32)
    t8 = (jax.random.uniform(ks[5], (64, 32, 128)) > 0.5).astype(jnp.float32)
    check(label_smoothing_focal_loss(x8, t8), _reference(x8, t8),
          rtol=3e-5, msg="medium")

    print("KERNEL_OK")
</pallas_src>

<mosaic_0001>
module attributes {stable_mosaic.version = 11 : i64} {
  func.func @_focal_loss_kernel(%arg0: i32, %arg1: i32, %arg2: memref<16x128xf32, #tpu.memory_space<vmem>>, %arg3: memref<16x128xf32, #tpu.memory_space<vmem>>, %arg4: memref<1x1xf32, #tpu.memory_space<vmem>>, %arg5: memref<8x128xf32, #tpu.memory_space<vmem>>) attributes {dimension_semantics = [#tpu.dimension_semantics<parallel>, #tpu.dimension_semantics<arbitrary>], iteration_bounds = array<i64: 1, 1>, scalar_prefetch = 0 : i64, scratch_operands = 1 : i64, tpu.core_type = #tpu.core_type<tc>, window_params = [{transform_indices = @transform_0, window_bounds = array<i64: 16, 128>}, {transform_indices = @transform_1, window_bounds = array<i64: 16, 128>}, {transform_indices = @transform_2, window_bounds = array<i64: 1, 1>}]} {
    %c0_i32 = arith.constant 0 : i32
    %0 = arith.cmpi eq, %arg1, %c0_i32 : i32
    %1 = arith.extui %0 : i1 to i32
    %c0_i32_0 = arith.constant 0 : i32
    %2 = arith.cmpi ne, %1, %c0_i32_0 : i32
    scf.if %2 {
      %cst_16 = arith.constant 0.000000e+00 : f32
      %40 = vector.broadcast %cst_16 : f32 to vector<8x128xf32>
      %c0_17 = arith.constant 0 : index
      %c0_18 = arith.constant 0 : index
      %41 = vector.load %arg5[%c0_17, %c0_18] : memref<8x128xf32, #tpu.memory_space<vmem>>, vector<8x128xf32>
      tpu.vector_store %arg5[%c0_17, %c0_18], %40 {strides = array<i32>} : memref<8x128xf32, #tpu.memory_space<vmem>>, vector<8x128xf32>,
    } else {
    }
    %c0 = arith.constant 0 : index
    %c0_1 = arith.constant 0 : index
    %3 = vector.load %arg5[%c0, %c0_1] : memref<8x128xf32, #tpu.memory_space<vmem>>, vector<8x128xf32>
    %cst = arith.constant 0.000000e+00 : f32
    %4 = vector.broadcast %cst : f32 to vector<8x128xf32>
    %c0_i32_2 = arith.constant 0 : i32
    %c16_i32 = arith.constant 16 : i32
    %5 = arith.muli %c0_i32_2, %c16_i32 : i32
    %6 = tpu.assume_multiple %5, 16 : i32
    %7 = arith.index_cast %6 : i32 to index
    %c0_3 = arith.constant 0 : index
    %8 = vector.load %arg2[%7, %c0_3] : memref<16x128xf32, #tpu.memory_space<vmem>>, vector<16x128xf32>
    %9 = arith.index_cast %6 : i32 to index
    %c0_4 = arith.constant 0 : index
    %10 = vector.load %arg3[%9, %c0_4] : memref<16x128xf32, #tpu.memory_space<vmem>>, vector<16x128xf32>
    %cst_5 = arith.constant 0.899999976 : f32
    %11 = vector.broadcast %cst_5 : f32 to vector<16x128xf32>
    %12 = arith.mulf %10, %11 : vector<16x128xf32>
    %cst_6 = arith.constant 5.000000e-02 : f32
    %13 = vector.broadcast %cst_6 : f32 to vector<16x128xf32>
    %14 = arith.addf %12, %13 : vector<16x128xf32>
    %cst_7 = arith.constant 0.000000e+00 : f32
    %15 = vector.broadcast %cst_7 : f32 to vector<16x128xf32>
    %16 = arith.maximumf %8, %15 : vector<16x128xf32>
    %17 = arith.mulf %8, %14 : vector<16x128xf32>
    %18 = arith.subf %16, %17 : vector<16x128xf32>
    %19 = math.absf %8 : vector<16x128xf32>
    %cst_8 = arith.constant 0.000000e+00 : f32
    %20 = vector.broadcast %cst_8 : f32 to vector<16x128xf32>
    %21 = arith.subf %20, %19 : vector<16x128xf32>
    %22 = math.exp %21 : vector<16x128xf32>
    %23 = math.log1p %22 : vector<16x128xf32>
    %24 = arith.addf %18, %23 : vector<16x128xf32>
    %cst_9 = arith.constant 0.000000e+00 : f32
    %25 = vector.broadcast %cst_9 : f32 to vector<16x128xf32>
    %26 = arith.subf %25, %24 : vector<16x128xf32>
    %27 = math.exp %26 : vector<16x128xf32>
    %cst_10 = arith.constant 1.000000e+00 : f32
    %28 = vector.broadcast %cst_10 : f32 to vector<16x128xf32>
    %29 = arith.subf %28, %27 : vector<16x128xf32>
    %30 = arith.mulf %29, %29 : vector<16x128xf32>
    %31 = arith.mulf %30, %24 : vector<16x128xf32>
    %32 = vector.shape_cast %31 : vector<16x128xf32> to vector<2x8x128xf32>
    %cst_11 = arith.constant dense<0.000000e+00> : vector<8x128xf32>
    %33 = vector.multi_reduction <add>, %32, %cst_11 [0] : vector<2x8x128xf32> to vector<8x128xf32>
    %34 = arith.addf %4, %33 : vector<8x128xf32>
    %c1_i32 = arith.constant 1 : i32
    %35 = arith.addf %3, %34 : vector<8x128xf32>
    %c0_12 = arith.constant 0 : index
    %c0_13 = arith.constant 0 : index
    %36 = vector.load %arg5[%c0_12, %c0_13] : memref<8x128xf32, #tpu.memory_space<vmem>>, vector<8x128xf32>
    tpu.vector_store %arg5[%c0_12, %c0_13], %35 {strides = array<i32>} : memref<8x128xf32, #tpu.memory_space<vmem>>, vector<8x128xf32>,
    %c0_i32_14 = arith.constant 0 : i32
    %37 = arith.cmpi eq, %arg1, %c0_i32_14 : i32
    %38 = arith.extui %37 : i1 to i32
    %c0_i32_15 = arith.constant 0 : i32
    %39 = arith.cmpi ne, %38, %c0_i32_15 : i32
    scf.if %39 {
      %c0_16 = arith.constant 0 : index
      %c0_17 = arith.constant 0 : index
      %40 = vector.load %arg5[%c0_16, %c0_17] : memref<8x128xf32, #tpu.memory_space<vmem>>, vector<8x128xf32>
      %41 = vector.shape_cast %40 : vector<8x128xf32> to vector<1x8x128xf32>
      %cst_18 = arith.constant dense<0.000000e+00> : vector<1xf32>
      %42 = vector.multi_reduction <add>, %41, %cst_18 [1, 2] : vector<1x8x128xf32> to vector<1xf32>
      %43 = vector.shape_cast %42 : vector<1xf32> to vector<1x1x1xf32>
      %44 = vector.extract %43[0, 0, 0] : f32 from vector<1x1x1xf32>
      %45 = vector.broadcast %44 : f32 to vector<1x1xf32>
      %c0_19 = arith.constant 0 : index
      %c0_20 = arith.constant 0 : index
      %46 = vector.load %arg4[%c0_19, %c0_20] : memref<1x1xf32, #tpu.memory_space<vmem>>, vector<1x1xf32>
      tpu.vector_store %arg4[%c0_19, %c0_20], %45 {strides = array<i32>} : memref<1x1xf32, #tpu.memory_space<vmem>>, vector<1x1xf32>,
    } else {
    }
    return
  }
  func.func @transform_0(%arg0: i32, %arg1: i32) -> (i32, i32) {
    %c1_i32 = arith.constant 1 : i32
    %0 = arith.muli %arg0, %c1_i32 : i32
    %1 = arith.addi %0, %arg1 : i32
    %c0_i32 = arith.constant 0 : i32
    %2 = arith.minsi %1, %c0_i32 : i32
    %c0_i32_0 = arith.constant 0 : i32
    %c0_i32_1 = arith.constant 0 : i32
    return %2, %c0_i32_0 : i32, i32
  }
  func.func @transform_1(%arg0: i32, %arg1: i32) -> (i32, i32) {
    %c1_i32 = arith.constant 1 : i32
    %0 = arith.muli %arg0, %c1_i32 : i32
    %1 = arith.addi %0, %arg1 : i32
    %c0_i32 = arith.constant 0 : i32
    %2 = arith.minsi %1, %c0_i32 : i32
    %c0_i32_0 = arith.constant 0 : i32
    %c0_i32_1 = arith.constant 0 : i32
    return %2, %c0_i32_0 : i32, i32
  }
  func.func @transform_2(%arg0: i32, %arg1: i32) -> (i32, i32) {
    %c0_i32 = arith.constant 0 : i32
    %c0_i32_0 = arith.constant 0 : i32
    return %arg0, %c0_i32 : i32, i32
  }
}

</mosaic_0001>

<llo_original>
// kernel: tpu_custom_call.1
$region0: #{tpu_custom_call.1}
  #allocation0 [shape = 'u32[]', space=smem, size = 0x4, offset = 0x4, fixed_abs, tag = 'smem constant byte address 0x4 - core index']
  #allocation1 [shape = 'u32[72,128]{1,0:T(1,128)}', space=vmem, size = 0x9000, scoped, tag = 'internal scratch']
  #allocation2 [shape = 'f32[8,128]{1,0:T(8,128)}', space=vmem, size = 0x1000, scoped, tag = 'scratch operand']
  %s0 = inlined_call_operand.hbm [shape: f32[16,128], index: 0, kind: input, shape index: {}]
  %s1 = inlined_call_operand.hbm [shape: f32[16,128], index: 1, kind: input, shape index: {}]
  %s2 = inlined_call_operand.hbm [shape: f32[1,1], index: 2, kind: output, shape index: {}]
  %s3 = sld [smem:[#allocation0]]
  $region34: #{tpu_custom_call.1} parent=0
    _
  %s5 = ssub.s32 1, %s3
  %s6 = scalar_select 0, %s5, %s3
  $region1: #{tpu_custom_call.1} parent=0
    #allocation3 [shape = 'u8[8192]{0}', space=vmem, size = 0x2000, scoped, tag = 'input window, operand 0, single buffered']
    #allocation4 [shape = 's32[1]{0}', space=sflag, size = 0x4, scoped, tag = 'scoped memory for tpu_custom_call.1']
    #allocation5 [shape = 's32[1]{0}', space=sflag, size = 0x4, scoped, tag = 'scoped memory for tpu_custom_call.1']
    #allocation6 [shape = 'u8[8192]{0}', space=vmem, size = 0x2000, scoped, tag = 'input window, operand 1, single buffered']
    #allocation7 [shape = 's32[1]{0}', space=sflag, size = 0x4, scoped, tag = 'scoped memory for tpu_custom_call.1']
    #allocation8 [shape = 'u8[512]{0}', space=vmem, size = 0x400, scoped, tag = 'output window, operand 0, single buffered']
    %7 = vsyncpa [#allocation4], 0
    %8 = vsyncpa [#allocation7], 0
    %9 = vsyncpa [#allocation5], 0
    // Predicated region
    $region2: #{tpu_custom_call.1} parent=1 // pred_check
      _
    $region3: #{tpu_custom_call.1} parent=1 // pred_check_branch
      %11 = sbr.rel (0) target = $region5
    $region4: #{tpu_custom_call.1} parent=1 // pred_region
      %s12 = sadd.s32 0, 0
      %p13 = scmp.lt.s32.totalorder %s12, 0
      %s14 = scalar_select %p13, %s12, 0
      %s15 = smul.u32 2, %s14
      %17 = vsyncadd [#allocation4], 0
      %s18 = smul.addr %s15, 8
      %s19 = scalar_lea.hbm %s0, %s18
      %s20 = sshll.u32 %s19, 4
      %s21 = int_to_ptr.hbm [resolvable:$true] %s20
      %s22 = sshll.u32 [#allocation3], 4
      %s23 = int_to_ptr.vmem [resolvable:$true] %s22
      %28 = dma.hbm_to_vmem [thread:$0]  %s21, 256, %s23, [#allocation4], 128, 128, 8
    $region5: #{tpu_custom_call.1} parent=1 // pred_fallthru
      _
    // Predicated region
    $region6: #{tpu_custom_call.1} parent=1 // pred_check
      _
    $region7: #{tpu_custom_call.1} parent=1 // pred_check_branch
      %30 = sbr.rel (0) target = $region9
    $region8: #{tpu_custom_call.1} parent=1 // pred_region
      %s31 = sadd.s32 0, 0
      %p32 = scmp.lt.s32.totalorder %s31, 0
      %s33 = scalar_select %p32, %s31, 0
      %s34 = smul.u32 2, %s33
      %36 = vsyncadd [#allocation7], 0
      %s37 = smul.addr %s34, 8
      %s38 = scalar_lea.hbm %s1, %s37
      %s39 = sshll.u32 %s38, 4
      %s40 = int_to_ptr.hbm [resolvable:$true] %s39
      %s41 = sshll.u32 [#allocation6], 4
      %s42 = int_to_ptr.vmem [resolvable:$true] %s41
      %47 = dma.hbm_to_vmem [thread:$0]  %s40, 256, %s42, [#allocation7], 128, 128, 8
    $region9: #{tpu_custom_call.1} parent=1 // pred_fallthru
      _
    // Predicated region
    $region10: #{tpu_custom_call.1} parent=1 // pred_check
      _
    $region11: #{tpu_custom_call.1} parent=1 // pred_check_branch
      %49 = sbr.rel (0) target = $region13
    $region12: #{tpu_custom_call.1} parent=1 // pred_region
      %51 = dma.done [#allocation4], 256
    $region13: #{tpu_custom_call.1} parent=1 // pred_fallthru
      _
    // Predicated region
    $region14: #{tpu_custom_call.1} parent=1 // pred_check
      _
    $region15: #{tpu_custom_call.1} parent=1 // pred_check_branch
      %53 = sbr.rel (0) target = $region17
    $region16: #{tpu_custom_call.1} parent=1 // pred_region
      %55 = dma.done [#allocation7], 256
    $region17: #{tpu_custom_call.1} parent=1 // pred_fallthru
      _
    %s56 = sadd.s32 0, 0
    %p57 = scmp.lt.s32.totalorder %s56, 0
    %s58 = scalar_select %p57, %s56, 0
    %s59 = smul.u32 2, %s58
    %s60 = sadd.s32 0, 0
    %p61 = scmp.lt.s32.totalorder %s60, 0
    %s62 = scalar_select %p61, %s60, 0
    %s63 = smul.u32 2, %s62
    %p64 = scmp.eq.s32.totalorder 0, 0
    // Predicated region
    $region18: #{tpu_custom_call.1} parent=1 // pred_check
      %p65 = pneg %p64
    $region19: #{tpu_custom_call.1} parent=1 // pred_check_branch
      %67 = sbr.rel (%p65) target = $region21
    $region20: #{tpu_custom_call.1} parent=1 // pred_region
      %68 = vst [vmem:[#allocation2] sm:$0xff] 0.0
    $region21: #{tpu_custom_call.1} parent=1 // pred_fallthru
      _
    %v69 = vld [vmem:[#allocation2] sm:$0xff]
    %v70 = vld [vmem:[#allocation3] sm:$0xff]
    %v71 = vld [vmem:[#allocation3 + $0x8] sm:$0xff]
    %v72 = vld [vmem:[#allocation6] sm:$0xff]
    %v73 = vld [vmem:[#allocation6 + $0x8] sm:$0xff]
    %v74 = vmul.f32 %v72, 0.9
    %v75 = vmul.f32 %v73, 0.9
    %v76 = vadd.f32 %v74, 0.05
    %v77 = vadd.f32 %v75, 0.05
    %v78 = vmax.f32 %v70, 0.0
    %v79 = vmax.f32 %v71, 0.0
    %v80 = vmul.f32 %v70, %v76
    %v81 = vmul.f32 %v71, %v77
    %v82 = vsub.f32 %v78, %v80
    %v83 = vsub.f32 %v79, %v81
    %v84 = vand.u32 2147483647, %v70
    %v85 = vand.u32 2147483647, %v71
    %v86 = vsub.f32 0.0, %v84
    %v87 = vsub.f32 0.0, %v85
    %v88 = vmul.f32 %v86, 1.442695
    %v89 = vpow.pop %v88
    %v90 = vmul.f32 %v87, 1.442695
    %v91 = vpow.pop %v90
    %v92 = vadd.f32 %v89, 1.0
    %v93 = vlog2.pop %v92
    %v94 = vmul.f32 %v93, 0.6931472
    %v95 = vmul.f32 -0.5, %v89
    %v96 = vadd.f32 %v95, 1.0
    %v97 = vmul.f32 %v96, %v89
    %v98 = vand.u32 2147483647, %v89
    %vm99 = vcmp.lt.f32.partialorder %v98, 0.0004427343
    %v100 = vsel %vm99, %v97, %v94
    %v101 = vadd.f32 %v91, 1.0
    %v102 = vlog2.pop %v101
    %v103 = vmul.f32 %v102, 0.6931472
    %v104 = vmul.f32 -0.5, %v91
    %v105 = vadd.f32 %v104, 1.0
    %v106 = vmul.f32 %v105, %v91
    %v107 = vand.u32 2147483647, %v91
    %vm108 = vcmp.lt.f32.partialorder %v107, 0.0004427343
    %v109 = vsel %vm108, %v106, %v103
    %v110 = vadd.f32 %v82, %v100
    %v111 = vadd.f32 %v83, %v109
    %v112 = vsub.f32 0.0, %v110
    %v113 = vsub.f32 0.0, %v111
    %v114 = vmul.f32 %v112, 1.442695
    %v115 = vpow.pop %v114
    %v116 = vmul.f32 %v113, 1.442695
    %v117 = vpow.pop %v116
    %v118 = vsub.f32 1.0, %v115
    %v119 = vsub.f32 1.0, %v117
    %v120 = vmul.f32 %v118, %v118
    %v121 = vmul.f32 %v119, %v119
    %v122 = vmul.f32 %v120, %v110
    %v123 = vmul.f32 %v121, %v111
    %v124 = vadd.f32 %v122, %v123
    %v125 = vadd.f32 %v124, 0.0
    %v126 = vadd.f32 %v69, %v125
    %127 = vst [vmem:[#allocation2] sm:$0xff] %v126
    // Predicated region
    $region22: #{tpu_custom_call.1} parent=1 // pred_check
      %p128 = pneg %p64
    $region23: #{tpu_custom_call.1} parent=1 // pred_check_branch
      %130 = sbr.rel (%p128) target = $region25
    $region24: #{tpu_custom_call.1} parent=1 // pred_region
      %v131 = vld [vmem:[#allocation2] sm:$0xff]
      %132 = vadd.xlane.f32.xlu0 %v131
      %v133 = vpop.xlane.xlu0 %132
      %v134 = vrot.slane %v133, 4
      %v135 = vadd.f32 %v133, %v134
      %v136 = vrot.slane %v135, 2
      %v137 = vadd.f32 %v135, %v136
      %v138 = vrot.slane %v137, 1
      %v139 = vadd.f32 %v137, %v138
      %s140 = vtos %v139
      %v141 = vstv %s140
      %vm142 = vcmask 0
      %143 = vst.msk [vmem:[#allocation8] sm:$0x1] %vm142, %v141
    $region25: #{tpu_custom_call.1} parent=1 // pred_fallthru
      _
    // Predicated region
    $region26: #{tpu_custom_call.1} parent=1 // pred_check
      _
    $region27: #{tpu_custom_call.1} parent=1 // pred_check_branch
      %145 = sbr.rel (0) target = $region29
    $region28: #{tpu_custom_call.1} parent=1 // pred_region
      %147 = vsyncadd [#allocation5], 0
      %s149 = sshll.u32 [#allocation8], 4
      %s150 = int_to_ptr.vmem [resolvable:$true] %s149
      %s151 = sshll.u32 %s2, 4
      %s152 = int_to_ptr.hbm [resolvable:$true] %s151
      %154 = dma.vmem_to_hbm [thread:$0]  %s150, 16, %s152, [#allocation5]
    $region29: #{tpu_custom_call.1} parent=1 // pred_fallthru
      _
    // Predicated region
    $region30: #{tpu_custom_call.1} parent=1 // pred_check
      _
    $region31: #{tpu_custom_call.1} parent=1 // pred_check_branch
      %156 = sbr.rel (0) target = $region33
    $region32: #{tpu_custom_call.1} parent=1 // pred_region
      %158 = dma.done [#allocation5], 16
    $region33: #{tpu_custom_call.1} parent=1 // pred_fallthru
      _
    %159 = vsyncpa [#allocation4], 1
    %160 = vsyncpa [#allocation7], 1
    %161 = vsyncpa [#allocation5], 1

</llo_original>
